<compile_context>
chip_gen: v7x
topology: tpu7x:2x2x1
jax: 0.10.0
libtpu: 0.0.40
codegen_flags: <defaults>
</compile_context>

<pallas_src>
import math
import functools

import jax
import jax.numpy as jnp
from jax.experimental import pallas as pl
from jax.experimental.pallas import tpu as pltpu

OUT_SIZE = 32                      # small stand-in for the hardcoded 224
BN_EPS = 1e-5
BN_SCALE = 1.0 / math.sqrt(1.0 + BN_EPS)   # inference BN with default stats

SOBEL_X = ((1.0, 0.0, -1.0),
           (2.0, 0.0, -2.0),
           (1.0, 0.0, -1.0))
SOBEL_Y = ((1.0, 2.0, 1.0),
           (0.0, 0.0, 0.0),
           (-1.0, -2.0, -1.0))


# ------------------------------ Pallas kernel ------------------------------

def _edge_kernel(w_ref, b_ref, x_ref, rh_ref, rw_ref, o_ref, *,
                 n_chan, tile_rows, out_w):
    """Fused conv1x1 -> bilinear upsample -> Sobel(+BN) -> sigmoid gate.

    Grid: (batch, out_size // tile_rows). Each step writes output rows
    [i*tile_rows, (i+1)*tile_rows) of one batch element.
    """
    # 1) 1x1 conv (C -> 1) on the SMALL input map (VPU fma loop, scalar
    #    weights from SMEM). Exactly commutes with the bilinear upsample.
    y = jnp.zeros(x_ref.shape[2:], jnp.float32)            # (Hin, Win)
    for c in range(n_chan):
        y = y + w_ref[c] * x_ref[0, c]
    y = y + b_ref[0]

    # 2) Separable bilinear upsample as two small MXU matmuls. rh/rw carry a
    #    zero border row/column, so `up` is the zero-padded upsampled image
    #    and the 3x3 Sobel halo comes for free.
    tmp = jnp.dot(y, rw_ref[...], preferred_element_type=jnp.float32)   # (Hin, OUT+2)
    r0 = pl.multiple_of(pl.program_id(1) * tile_rows, 8)
    rh_tile = rh_ref[pl.ds(r0, tile_rows + 2), :]                       # (TR+2, Hin)
    up = jnp.dot(rh_tile, tmp, preferred_element_type=jnp.float32)      # (TR+2, OUT+2)

    # 3) Sobel-x / Sobel-y via shifted slices of the padded tile, BN fold,
    #    gradient magnitude, sigmoid gate with the conv1x1 output.
    def win(dy, dx):
        return up[dy:dy + tile_rows, dx:dx + out_w]

    u = win(1, 1)                                   # = conv1x1(upsampled) tile
    gx = (win(0, 0) + 2.0 * win(1, 0) + win(2, 0)) \
       - (win(0, 2) + 2.0 * win(1, 2) + win(2, 2))
    gy = (win(0, 0) + 2.0 * win(0, 1) + win(0, 2)) \
       - (win(2, 0) + 2.0 * win(2, 1) + win(2, 2))
    gx = gx * BN_SCALE
    gy = gy * BN_SCALE
    g = jnp.sqrt(gx * gx + gy * gy)
    o_ref[0, 0] = (1.0 / (1.0 + jnp.exp(-g))) * u   # sigmoid(g) * input


# ------------------------------ host wrappers ------------------------------

def _interp_matrix(out_size, in_size):
    """Row matrix of F.interpolate(mode='bilinear', align_corners=False):
    out = M @ in ; every row of M sums to 1."""
    scale = in_size / out_size
    c = (jnp.arange(out_size, dtype=jnp.float32) + 0.5) * scale - 0.5
    c = jnp.clip(c, 0.0, in_size - 1)
    lo = jnp.floor(c).astype(jnp.int32)
    hi = jnp.minimum(lo + 1, in_size - 1)
    frac = c - lo.astype(jnp.float32)
    return (jax.nn.one_hot(lo, in_size, dtype=jnp.float32) * (1.0 - frac)[:, None]
            + jax.nn.one_hot(hi, in_size, dtype=jnp.float32) * frac[:, None])


def _pick_tile_rows(out_size, cap=64):
    """Largest multiple-of-8 divisor of out_size not exceeding `cap`
    (224 -> 56 row tiles of 4; 32 -> 32, i.e. one tile)."""
    best = 8
    for t in range(8, min(out_size, cap) + 1, 8):
        if out_size % t == 0:
            best = t
    return best


def edge_forward(params, x, out_size=OUT_SIZE):
    """Edge.forward: x (B, C, Hin, Win) NCHW -> (B, 1, out_size, out_size)."""
    B, C, Hin, Win = x.shape
    assert out_size % 8 == 0, "out_size must be a multiple of 8"
    tile_rows = _pick_tile_rows(out_size)
    n_row_tiles = out_size // tile_rows

    # Interp matrices with the Sobel zero-padding halo baked in as zero borders.
    rh_pad = jnp.pad(_interp_matrix(out_size, Hin), ((1, 1), (0, 0)))    # (OUT+2, Hin)
    rw_pad = jnp.pad(_interp_matrix(out_size, Win).T, ((0, 0), (1, 1)))  # (Win, OUT+2)

    kern = functools.partial(_edge_kernel, n_chan=C, tile_rows=tile_rows,
                             out_w=out_size)
    return pl.pallas_call(
        kern,
        out_shape=jax.ShapeDtypeStruct((B, 1, out_size, out_size), jnp.float32),
        grid=(B, n_row_tiles),
        in_specs=[
            pl.BlockSpec(memory_space=pltpu.MemorySpace.SMEM),            # w1 (C,)
            pl.BlockSpec(memory_space=pltpu.MemorySpace.SMEM),            # b1 (1,)
            pl.BlockSpec((1, C, Hin, Win), lambda b, i: (b, 0, 0, 0)),    # x
            pl.BlockSpec((out_size + 2, Hin), lambda b, i: (0, 0)),       # rh_pad
            pl.BlockSpec((Win, out_size + 2), lambda b, i: (0, 0)),       # rw_pad
        ],
        out_specs=pl.BlockSpec((1, 1, tile_rows, out_size),
                               lambda b, i: (b, 0, i, 0)),
        compiler_params=pltpu.CompilerParams(
            dimension_semantics=("parallel", "parallel")),
    )(params["w1"].astype(jnp.float32), params["b1"].astype(jnp.float32),
      x.astype(jnp.float32), rh_pad, rw_pad)


# -------------------- pure-JAX reference (original op order) ----------------

def bilinear_resize_nchw(x, out_h, out_w):
    B, C, H, W = x.shape

    def coords(out_size, in_size):
        scale = in_size / out_size
        c = (jnp.arange(out_size, dtype=jnp.float32) + 0.5) * scale - 0.5
        c = jnp.clip(c, 0.0, in_size - 1)
        lo = jnp.floor(c).astype(jnp.int32)
        hi = jnp.minimum(lo + 1, in_size - 1)
        frac = c - lo.astype(jnp.float32)
        return lo, hi, frac

    y0, y1, wy = coords(out_h, H)
    x0, x1, wx = coords(out_w, W)
    top, bot = x[:, :, y0, :], x[:, :, y1, :]

    def horiz(img):
        return img[:, :, :, x0] * (1.0 - wx) + img[:, :, :, x1] * wx

    return (horiz(top) * (1.0 - wy)[None, None, :, None]
            + horiz(bot) * wy[None, None, :, None])


def edge_reference(params, x, out_size):
    """Upsample -> conv1x1 -> sobel (exactly the PyTorch op order)."""
    up = bilinear_resize_nchw(x.astype(jnp.float32), out_size, out_size)
    w = params["w1"].reshape(1, -1, 1, 1)
    y = jnp.sum(up * w, axis=1, keepdims=True) + params["b1"].reshape(1, 1, 1, 1)
    ypad = jnp.pad(y, ((0, 0), (0, 0), (1, 1), (1, 1)))

    def conv3(k):
        acc = jnp.zeros_like(y)
        for dy in range(3):
            for dx in range(3):
                if k[dy][dx] != 0.0:
                    acc = acc + k[dy][dx] * ypad[:, :, dy:dy + out_size,
                                                 dx:dx + out_size]
        return acc

    gx = conv3(SOBEL_X) * BN_SCALE
    gy = conv3(SOBEL_Y) * BN_SCALE
    g = jnp.sqrt(gx * gx + gy * gy)
    return (1.0 / (1.0 + jnp.exp(-g))) * y


# ----------------------------------- demo -----------------------------------

if __name__ == "__main__":
    key = jax.random.PRNGKey(0)
    kw, kb, kx = jax.random.split(key, 3)
    B, C, HIN, WIN = 2, 4, 16, 16
    params = {
        # PyTorch: conv1x1.weight (1, C, 1, 1) -> (C,), conv1x1.bias -> (1,)
        "w1": jax.random.normal(kw, (C,), jnp.float32) * 0.1,
        "b1": jax.random.normal(kb, (1,), jnp.float32) * 0.1,
    }
    x = jax.random.normal(kx, (B, C, HIN, WIN), jnp.float32)

    fwd = jax.jit(functools.partial(edge_forward, params, out_size=OUT_SIZE))
    y = fwd(x)
    jax.block_until_ready(y)

    assert y.shape == (B, 1, OUT_SIZE, OUT_SIZE), y.shape
    assert bool(jnp.all(jnp.isfinite(y)))

    y_ref = edge_reference(params, x, OUT_SIZE)
    assert bool(jnp.allclose(y, y_ref, atol=1e-3, rtol=1e-3)), \
        float(jnp.max(jnp.abs(y - y_ref)))
    print("KERNEL_OK")
</pallas_src>

<mosaic_0001>
module attributes {stable_mosaic.version = 11 : i64} {
  func.func @_edge_kernel(%arg0: i32, %arg1: i32, %arg2: memref<4xf32, #tpu.memory_space<smem>>, %arg3: memref<1xf32, #tpu.memory_space<smem>>, %arg4: memref<1x4x16x16xf32, #tpu.memory_space<vmem>>, %arg5: memref<34x16xf32, #tpu.memory_space<vmem>>, %arg6: memref<16x34xf32, #tpu.memory_space<vmem>>, %arg7: memref<1x1x32x32xf32, #tpu.memory_space<vmem>>) attributes {dimension_semantics = [#tpu.dimension_semantics<parallel>, #tpu.dimension_semantics<parallel>], iteration_bounds = array<i64: 2, 1>, scalar_prefetch = 0 : i64, scratch_operands = 0 : i64, tpu.core_type = #tpu.core_type<tc>, window_params = [{transform_indices = @transform_0, window_bounds = array<i64: 4>}, {transform_indices = @transform_1, window_bounds = array<i64: 1>}, {transform_indices = @transform_2, window_bounds = array<i64: 1, 4, 16, 16>}, {pipeline_mode = #tpu.pipeline_mode<synchronous>, transform_indices = @transform_3, window_bounds = array<i64: 34, 16>}, {pipeline_mode = #tpu.pipeline_mode<synchronous>, transform_indices = @transform_4, window_bounds = array<i64: 16, 34>}, {transform_indices = @transform_5, window_bounds = array<i64: 1, 1, 32, 32>}]} {
    %cst = arith.constant 0.000000e+00 : f32
    %0 = vector.broadcast %cst : f32 to vector<16x16xf32>
    %c0 = arith.constant 0 : index
    %1 = memref.load %arg2[%c0] : memref<4xf32, #tpu.memory_space<smem>>
    %c0_0 = arith.constant 0 : index
    %c0_1 = arith.constant 0 : index
    %c0_2 = arith.constant 0 : index
    %c0_3 = arith.constant 0 : index
    %2 = vector.load %arg4[%c0_0, %c0_1, %c0_2, %c0_3] : memref<1x4x16x16xf32, #tpu.memory_space<vmem>>, vector<1x1x16x16xf32>
    %3 = vector.shape_cast %2 : vector<1x1x16x16xf32> to vector<16x16xf32>
    %4 = vector.broadcast %1 : f32 to vector<16x16xf32>
    %5 = arith.mulf %4, %3 : vector<16x16xf32>
    %6 = arith.addf %0, %5 : vector<16x16xf32>
    %c1 = arith.constant 1 : index
    %7 = memref.load %arg2[%c1] : memref<4xf32, #tpu.memory_space<smem>>
    %c0_4 = arith.constant 0 : index
    %c1_5 = arith.constant 1 : index
    %c0_6 = arith.constant 0 : index
    %c0_7 = arith.constant 0 : index
    %8 = vector.load %arg4[%c0_4, %c1_5, %c0_6, %c0_7] : memref<1x4x16x16xf32, #tpu.memory_space<vmem>>, vector<1x1x16x16xf32>
    %9 = vector.shape_cast %8 : vector<1x1x16x16xf32> to vector<16x16xf32>
    %10 = vector.broadcast %7 : f32 to vector<16x16xf32>
    %11 = arith.mulf %10, %9 : vector<16x16xf32>
    %12 = arith.addf %6, %11 : vector<16x16xf32>
    %c2 = arith.constant 2 : index
    %13 = memref.load %arg2[%c2] : memref<4xf32, #tpu.memory_space<smem>>
    %c0_8 = arith.constant 0 : index
    %c2_9 = arith.constant 2 : index
    %c0_10 = arith.constant 0 : index
    %c0_11 = arith.constant 0 : index
    %14 = vector.load %arg4[%c0_8, %c2_9, %c0_10, %c0_11] : memref<1x4x16x16xf32, #tpu.memory_space<vmem>>, vector<1x1x16x16xf32>
    %15 = vector.shape_cast %14 : vector<1x1x16x16xf32> to vector<16x16xf32>
    %16 = vector.broadcast %13 : f32 to vector<16x16xf32>
    %17 = arith.mulf %16, %15 : vector<16x16xf32>
    %18 = arith.addf %12, %17 : vector<16x16xf32>
    %c3 = arith.constant 3 : index
    %19 = memref.load %arg2[%c3] : memref<4xf32, #tpu.memory_space<smem>>
    %c0_12 = arith.constant 0 : index
    %c3_13 = arith.constant 3 : index
    %c0_14 = arith.constant 0 : index
    %c0_15 = arith.constant 0 : index
    %20 = vector.load %arg4[%c0_12, %c3_13, %c0_14, %c0_15] : memref<1x4x16x16xf32, #tpu.memory_space<vmem>>, vector<1x1x16x16xf32>
    %21 = vector.shape_cast %20 : vector<1x1x16x16xf32> to vector<16x16xf32>
    %22 = vector.broadcast %19 : f32 to vector<16x16xf32>
    %23 = arith.mulf %22, %21 : vector<16x16xf32>
    %24 = arith.addf %18, %23 : vector<16x16xf32>
    %c0_16 = arith.constant 0 : index
    %25 = memref.load %arg3[%c0_16] : memref<1xf32, #tpu.memory_space<smem>>
    %26 = vector.broadcast %25 : f32 to vector<16x16xf32>
    %27 = arith.addf %24, %26 : vector<16x16xf32>
    %c0_17 = arith.constant 0 : index
    %c0_18 = arith.constant 0 : index
    %28 = vector.load %arg6[%c0_17, %c0_18] : memref<16x34xf32, #tpu.memory_space<vmem>>, vector<16x34xf32>
    %cst_19 = arith.constant dense<0.000000e+00> : vector<16x34xf32>
    %29 = tpu.matmul %27, %28, %cst_19 {dimension_numbers = #tpu.dot_dimension_numbers<[1], [0], [0], [1], [0, 0, 1, 1], [], []>} : vector<16x16xf32>, vector<16x34xf32>, vector<16x34xf32> -> vector<16x34xf32>
    %c32_i32 = arith.constant 32 : i32
    %30 = arith.muli %arg1, %c32_i32 : i32
    %31 = tpu.assume_multiple %30, 8 : i32
    %32 = arith.index_cast %31 : i32 to index
    %c0_20 = arith.constant 0 : index
    %33 = vector.load %arg5[%32, %c0_20] : memref<34x16xf32, #tpu.memory_space<vmem>>, vector<34x16xf32>
    %cst_21 = arith.constant dense<0.000000e+00> : vector<34x34xf32>
    %34 = tpu.matmul %33, %29, %cst_21 {dimension_numbers = #tpu.dot_dimension_numbers<[1], [0], [0], [1], [0, 0, 1, 1], [], []>} : vector<34x16xf32>, vector<16x34xf32>, vector<34x34xf32> -> vector<34x34xf32>
    %35 = vector.extract_strided_slice %34 {offsets = [1, 1], sizes = [32, 32], strides = [1, 1]} : vector<34x34xf32> to vector<32x32xf32>
    %36 = vector.extract_strided_slice %34 {offsets = [0, 0], sizes = [32, 32], strides = [1, 1]} : vector<34x34xf32> to vector<32x32xf32>
    %37 = vector.extract_strided_slice %34 {offsets = [1, 0], sizes = [32, 32], strides = [1, 1]} : vector<34x34xf32> to vector<32x32xf32>
    %cst_22 = arith.constant 2.000000e+00 : f32
    %38 = vector.broadcast %cst_22 : f32 to vector<32x32xf32>
    %39 = arith.mulf %38, %37 : vector<32x32xf32>
    %40 = arith.addf %36, %39 : vector<32x32xf32>
    %41 = vector.extract_strided_slice %34 {offsets = [2, 0], sizes = [32, 32], strides = [1, 1]} : vector<34x34xf32> to vector<32x32xf32>
    %42 = arith.addf %40, %41 : vector<32x32xf32>
    %43 = vector.extract_strided_slice %34 {offsets = [0, 2], sizes = [32, 32], strides = [1, 1]} : vector<34x34xf32> to vector<32x32xf32>
    %44 = vector.extract_strided_slice %34 {offsets = [1, 2], sizes = [32, 32], strides = [1, 1]} : vector<34x34xf32> to vector<32x32xf32>
    %cst_23 = arith.constant 2.000000e+00 : f32
    %45 = vector.broadcast %cst_23 : f32 to vector<32x32xf32>
    %46 = arith.mulf %45, %44 : vector<32x32xf32>
    %47 = arith.addf %43, %46 : vector<32x32xf32>
    %48 = vector.extract_strided_slice %34 {offsets = [2, 2], sizes = [32, 32], strides = [1, 1]} : vector<34x34xf32> to vector<32x32xf32>
    %49 = arith.addf %47, %48 : vector<32x32xf32>
    %50 = arith.subf %42, %49 : vector<32x32xf32>
    %51 = vector.extract_strided_slice %34 {offsets = [0, 0], sizes = [32, 32], strides = [1, 1]} : vector<34x34xf32> to vector<32x32xf32>
    %52 = vector.extract_strided_slice %34 {offsets = [0, 1], sizes = [32, 32], strides = [1, 1]} : vector<34x34xf32> to vector<32x32xf32>
    %cst_24 = arith.constant 2.000000e+00 : f32
    %53 = vector.broadcast %cst_24 : f32 to vector<32x32xf32>
    %54 = arith.mulf %53, %52 : vector<32x32xf32>
    %55 = arith.addf %51, %54 : vector<32x32xf32>
    %56 = vector.extract_strided_slice %34 {offsets = [0, 2], sizes = [32, 32], strides = [1, 1]} : vector<34x34xf32> to vector<32x32xf32>
    %57 = arith.addf %55, %56 : vector<32x32xf32>
    %58 = vector.extract_strided_slice %34 {offsets = [2, 0], sizes = [32, 32], strides = [1, 1]} : vector<34x34xf32> to vector<32x32xf32>
    %59 = vector.extract_strided_slice %34 {offsets = [2, 1], sizes = [32, 32], strides = [1, 1]} : vector<34x34xf32> to vector<32x32xf32>
    %cst_25 = arith.constant 2.000000e+00 : f32
    %60 = vector.broadcast %cst_25 : f32 to vector<32x32xf32>
    %61 = arith.mulf %60, %59 : vector<32x32xf32>
    %62 = arith.addf %58, %61 : vector<32x32xf32>
    %63 = vector.extract_strided_slice %34 {offsets = [2, 2], sizes = [32, 32], strides = [1, 1]} : vector<34x34xf32> to vector<32x32xf32>
    %64 = arith.addf %62, %63 : vector<32x32xf32>
    %65 = arith.subf %57, %64 : vector<32x32xf32>
    %cst_26 = arith.constant 0.999994993 : f32
    %66 = vector.broadcast %cst_26 : f32 to vector<32x32xf32>
    %67 = arith.mulf %50, %66 : vector<32x32xf32>
    %cst_27 = arith.constant 0.999994993 : f32
    %68 = vector.broadcast %cst_27 : f32 to vector<32x32xf32>
    %69 = arith.mulf %65, %68 : vector<32x32xf32>
    %70 = arith.mulf %67, %67 : vector<32x32xf32>
    %71 = arith.mulf %69, %69 : vector<32x32xf32>
    %72 = arith.addf %70, %71 : vector<32x32xf32>
    %73 = math.sqrt %72 : vector<32x32xf32>
    %cst_28 = arith.constant 0.000000e+00 : f32
    %74 = vector.broadcast %cst_28 : f32 to vector<32x32xf32>
    %75 = arith.subf %74, %73 : vector<32x32xf32>
    %76 = math.exp %75 : vector<32x32xf32>
    %cst_29 = arith.constant 1.000000e+00 : f32
    %77 = vector.broadcast %cst_29 : f32 to vector<32x32xf32>
    %78 = arith.addf %77, %76 : vector<32x32xf32>
    %cst_30 = arith.constant 1.000000e+00 : f32
    %79 = vector.broadcast %cst_30 : f32 to vector<32x32xf32>
    %80 = arith.divf %79, %78 : vector<32x32xf32>
    %81 = arith.mulf %80, %35 : vector<32x32xf32>
    %c0_31 = arith.constant 0 : index
    %c0_32 = arith.constant 0 : index
    %c0_33 = arith.constant 0 : index
    %c0_34 = arith.constant 0 : index
    %82 = vector.load %arg7[%c0_31, %c0_32, %c0_33, %c0_34] : memref<1x1x32x32xf32, #tpu.memory_space<vmem>>, vector<1x1x32x32xf32>
    %83 = vector.shape_cast %82 : vector<1x1x32x32xf32> to vector<32x32xf32>
    %84 = vector.shape_cast %81 : vector<32x32xf32> to vector<1x1x32x32xf32>
    tpu.vector_store %arg7[%c0_31, %c0_32, %c0_33, %c0_34], %84 {strides = array<i32>} : memref<1x1x32x32xf32, #tpu.memory_space<vmem>>, vector<1x1x32x32xf32>,
    return
  }
  func.func @transform_0(%arg0: i32, %arg1: i32) -> i32 {
    %c0_i32 = arith.constant 0 : i32
    %c0_i32_0 = arith.constant 0 : i32
    return %c0_i32 : i32
  }
  func.func @transform_1(%arg0: i32, %arg1: i32) -> i32 {
    %c0_i32 = arith.constant 0 : i32
    %c0_i32_0 = arith.constant 0 : i32
    return %c0_i32 : i32
  }
  func.func @transform_2(%arg0: i32, %arg1: i32) -> (i32, i32, i32, i32) {
    %c0_i32 = arith.constant 0 : i32
    %c0_i32_0 = arith.constant 0 : i32
    %c0_i32_1 = arith.constant 0 : i32
    %c0_i32_2 = arith.constant 0 : i32
    return %arg0, %c0_i32, %c0_i32_0, %c0_i32_1 : i32, i32, i32, i32
  }
  func.func @transform_3(%arg0: i32, %arg1: i32) -> (i32, i32) {
    %c0_i32 = arith.constant 0 : i32
    %c0_i32_0 = arith.constant 0 : i32
    %c0_i32_1 = arith.constant 0 : i32
    return %c0_i32, %c0_i32_0 : i32, i32
  }
  func.func @transform_4(%arg0: i32, %arg1: i32) -> (i32, i32) {
    %c0_i32 = arith.constant 0 : i32
    %c0_i32_0 = arith.constant 0 : i32
    %c0_i32_1 = arith.constant 0 : i32
    return %c0_i32, %c0_i32_0 : i32, i32
  }
  func.func @transform_5(%arg0: i32, %arg1: i32) -> (i32, i32, i32, i32) {
    %c0_i32 = arith.constant 0 : i32
    %c0_i32_0 = arith.constant 0 : i32
    %c0_i32_1 = arith.constant 0 : i32
    return %arg0, %c0_i32, %arg1, %c0_i32_0 : i32, i32, i32, i32
  }
}

</mosaic_0001>

<llo_original>
// kernel: edge_forward.1
$region0: #{edge_forward.1}
  #allocation0 [shape = 'u32[]', space=smem, size = 0x4, offset = 0x4, fixed_abs, tag = 'smem constant byte address 0x4 - core index']
  #allocation1 [shape = 'u32[144,128]{1,0:T(1,128)}', space=vmem, size = 0x12000, scoped, tag = 'internal scratch']
  #allocation2 [shape = 'f32[1]{0:T(128)S(6)}', space=smem, size = 0x200, scoped, tag = 'scoped memory for edge_forward.1']
  %s0 = inlined_call_operand.vmem [shape: f32[4], index: 0, kind: input, shape index: {}]
  %s1 = inlined_call_operand.<no memory space> [shape: f32[1], index: 1, kind: input, shape index: {}]
  %s2 = inlined_call_operand.vmem [shape: f32[2,4,16,16], index: 2, kind: input, shape index: {}]
  %s3 = inlined_call_operand.vmem [shape: f32[34,16], index: 3, kind: input, shape index: {}]
  %s4 = inlined_call_operand.vmem [shape: f32[16,34], index: 4, kind: input, shape index: {}]
  %s5 = inlined_call_operand.hbm [shape: f32[2,1,32,32], index: 5, kind: output, shape index: {}]
  %s6 = sld [smem:[#allocation0]]
  $region57: #{edge_forward.1} parent=0
    _
  %s8 = ssub.s32 1, %s6
  %s9 = scalar_select 0, %s8, %s6
  %10 = sst [smem:[#allocation2]] %s1
  $region1: #{edge_forward.1} parent=0
    #allocation3 [shape = 'u8[512]{0}', space=smem, size = 0x200, scoped, tag = 'input window, operand 0, single buffered']
    #allocation4 [shape = 's32[2]{0}', space=sflag, size = 0x8, scoped, tag = 'scoped memory for edge_forward.1']
    #allocation5 [shape = 's32[2]{0}', space=sflag, size = 0x8, scoped, tag = 'scoped memory for edge_forward.1']
    #allocation6 [shape = 'u8[32768]{0}', space=vmem, size = 0x8000, scoped, tag = 'output window, operand 0']
    %11 = vsyncpa [#allocation5], 0
    %12 = vsyncpa [#allocation4], 0
    %s13 = scalar_lea.sflag [#allocation4], 1
    %14 = vsyncpa %s13, 0
    loop: start=0, step=1, limit=4
    $region2: #{edge_forward.1} parent=1 // loop_pre_header
      _
    $region3: #{edge_forward.1} parent=1 // loop_header
      %s16 = sphi 0, %s20
      %p17 = scmp.ge.s32.totalorder %s16, 4
      %s23 = sphi 0, %s35
      %s24 = sphi 0, %s31
      %s25 = sphi 0, %s23
      %s26 = sphi 0, %s24
      %s27 = sphi 0, %s25
      %s28 = sphi 0, %s26
      %s36 = sphi 0, %s36
      %s38 = sphi 0, %s36
      %s39 = sphi 0, %s38
      %s53 = sphi 0, %s39
      %s57 = sphi 0, %s57
      %s59 = sphi 0, %s57
      %s60 = sphi 0, %s59
      %s74 = sphi 0, %s60
      %s80 = sphi 0, %s82
      %s83 = sphi 0, %s80
      %s84 = sphi 0, %s83
      %s100 = sphi 0, %s84
      %s104 = sphi 0, %s104
      %s106 = sphi 0, %s104
      %s107 = sphi 0, %s106
      %s121 = sphi 0, %s107
      %s125 = sphi 0, %s125
      %s127 = sphi 0, %s125
      %s128 = sphi 0, %s127
      %s142 = sphi 0, %s128
      %s150 = sphi 0, %s152
      %s153 = sphi 0, %s150
      %s154 = sphi 0, %s153
      %s170 = sphi 0, %s154
    $region4: #{edge_forward.1} parent=1 // loop_header_branch
      %19 = sbr.rel (%p17) target = $region8
    $region5: #{edge_forward.1} parent=1 // loop_body
      %s21 = ssub.s32 %s16, 1
      %s22 = ssub.s32 %s16, 2
      %s29 = sadd.s32 1, %s24
      %p30 = scmp.ge.s32.totalorder %s29, 1
      %s31 = scalar_select %p30, 0, %s29
      %s32 = sadd.s32 1, %s23
      %s33 = scalar_select %p30, %s32, %s23
      %p34 = scmp.ge.s32.totalorder %s33, 2
      %s35 = scalar_select %p34, 0, %s33
      %s37 = sadd.s32 %s36, 1
      %p40 = scmp.eq.s32.totalorder %s16, 1
      %p41 = scmp.ne.s32.totalorder %s36, %s38
      %p42 = scmp.eq.s32.totalorder %s16, 0
      %p43 = por %p41, %p42
      %p44 = scmp.ne.s32.totalorder %s36, %s38
      %p45 = scmp.eq.s32.totalorder %s21, 1
      %p46 = por %p44, %p45
      %p47 = scmp.ne.s32.totalorder %s38, %s39
      %p48 = scmp.eq.s32.totalorder %s21, 0
      %p49 = por %p47, %p48
      %p50 = scmp.ne.s32.totalorder %s38, %s39
      %p51 = scmp.eq.s32.totalorder %s22, 1
      %p52 = por %p50, %p51
      %p54 = scmp.ne.s32.totalorder %s39, %s53
      %p55 = scmp.eq.s32.totalorder %s22, 0
      %p56 = por %p54, %p55
      %s58 = sadd.s32 %s57, 1
      %p61 = scmp.eq.s32.totalorder %s16, 1
      %p62 = scmp.ne.s32.totalorder %s57, %s59
      %p63 = scmp.eq.s32.totalorder %s16, 0
      %p64 = por %p62, %p63
      %p65 = scmp.ne.s32.totalorder %s57, %s59
      %p66 = scmp.eq.s32.totalorder %s21, 1
      %p67 = por %p65, %p66
      %p68 = scmp.ne.s32.totalorder %s59, %s60
      %p69 = scmp.eq.s32.totalorder %s21, 0
      %p70 = por %p68, %p69
      %p71 = scmp.ne.s32.totalorder %s59, %s60
      %p72 = scmp.eq.s32.totalorder %s22, 1
      %p73 = por %p71, %p72
      %p75 = scmp.ne.s32.totalorder %s60, %s74
      %p76 = scmp.eq.s32.totalorder %s22, 0
      %p77 = por %p75, %p76
      %s78 = ssub.s32 %s23, %s35
      %p79 = scmp.eq.s32.totalorder %s78, 0
      %s81 = sadd.s32 %s80, 1
      %s82 = scalar_select %p79, %s80, %s81
      %p85 = pneg %p79
      %p86 = scmp.eq.s32.totalorder %s16, 1
      %p87 = por %p85, %p86
      %p88 = scmp.ne.s32.totalorder %s80, %s83
      %p89 = scmp.eq.s32.totalorder %s16, 0
      %p90 = por %p88, %p89
      %p91 = scmp.ne.s32.totalorder %s80, %s83
      %p92 = scmp.eq.s32.totalorder %s21, 1
      %p93 = por %p91, %p92
      %p94 = scmp.ne.s32.totalorder %s83, %s84
      %p95 = scmp.eq.s32.totalorder %s21, 0
      %p96 = por %p94, %p95
      %p97 = scmp.ne.s32.totalorder %s83, %s84
      %p98 = scmp.eq.s32.totalorder %s22, 1
      %p99 = por %p97, %p98
      %p101 = scmp.ne.s32.totalorder %s84, %s100
      %p102 = scmp.eq.s32.totalorder %s22, 0
      %p103 = por %p101, %p102
      %s105 = sadd.s32 %s104, 1
      %p108 = scmp.eq.s32.totalorder %s16, 1
      %p109 = scmp.ne.s32.totalorder %s104, %s106
      %p110 = scmp.eq.s32.totalorder %s16, 0
      %p111 = por %p109, %p110
      %p112 = scmp.ne.s32.totalorder %s104, %s106
      %p113 = scmp.eq.s32.totalorder %s21, 1
      %p114 = por %p112, %p113
      %p115 = scmp.ne.s32.totalorder %s106, %s107
      %p116 = scmp.eq.s32.totalorder %s21, 0
      %p117 = por %p115, %p116
      %p118 = scmp.ne.s32.totalorder %s106, %s107
      %p119 = scmp.eq.s32.totalorder %s22, 1
      %p120 = por %p118, %p119
      %p122 = scmp.ne.s32.totalorder %s107, %s121
      %p123 = scmp.eq.s32.totalorder %s22, 0
      %p124 = por %p122, %p123
      %s126 = sadd.s32 %s125, 1
      %p129 = scmp.eq.s32.totalorder %s16, 1
      %p130 = scmp.ne.s32.totalorder %s125, %s127
      %p131 = scmp.eq.s32.totalorder %s16, 0
      %p132 = por %p130, %p131
      %p133 = scmp.ne.s32.totalorder %s125, %s127
      %p134 = scmp.eq.s32.totalorder %s21, 1
      %p135 = por %p133, %p134
      %p136 = scmp.ne.s32.totalorder %s127, %s128
      %p137 = scmp.eq.s32.totalorder %s21, 0
      %p138 = por %p136, %p137
      %p139 = scmp.ne.s32.totalorder %s127, %s128
      %p140 = scmp.eq.s32.totalorder %s22, 1
      %p141 = por %p139, %p140
      %p143 = scmp.ne.s32.totalorder %s128, %s142
      %p144 = scmp.eq.s32.totalorder %s22, 0
      %p145 = por %p143, %p144
      %s146 = ssub.s32 %s23, %s35
      %s147 = ssub.s32 %s24, %s31
      %s148 = sor.u32 %s146, %s147
      %p149 = scmp.eq.s32.totalorder %s148, 0
      %s151 = sadd.s32 %s150, 1
      %s152 = scalar_select %p149, %s150, %s151
      %p155 = pneg %p149
      %p156 = scmp.eq.s32.totalorder %s16, 1
      %p157 = por %p155, %p156
      %p158 = scmp.ne.s32.totalorder %s150, %s153
      %p159 = scmp.eq.s32.totalorder %s16, 0
      %p160 = por %p158, %p159
      %p161 = scmp.ne.s32.totalorder %s150, %s153
      %p162 = scmp.eq.s32.totalorder %s21, 1
      %p163 = por %p161, %p162
      %p164 = scmp.ne.s32.totalorder %s153, %s154
      %p165 = scmp.eq.s32.totalorder %s21, 0
      %p166 = por %p164, %p165
      %p167 = scmp.ne.s32.totalorder %s153, %s154
      %p168 = scmp.eq.s32.totalorder %s22, 1
      %p169 = por %p167, %p168
      %p171 = scmp.ne.s32.totalorder %s154, %s170
      %p172 = scmp.eq.s32.totalorder %s22, 0
      %p173 = por %p171, %p172
      %p174 = scmp.le.s32.totalorder 1, %s16
      %p175 = scmp.lt.s32.totalorder %s16, 3
      %p176 = pnand %p174, %p175
      %p177 = pneg %p176
      // Predicated region
      $region9: #{edge_forward.1} parent=5 // pred_check
        _
      $region10: #{edge_forward.1} parent=5 // pred_check_branch
        %179 = sbr.rel (%p176) target = $region12
      $region11: #{edge_forward.1} parent=5 // pred_region
        %s180 = ssub.s32 %s16, 1
        // Predicated region
        $region13: #{edge_forward.1} parent=11 // pred_check
          %p181 = pneg %p49
        $region14: #{edge_forward.1} parent=11 // pred_check_branch
          %183 = sbr.rel (%p181) target = $region16
        $region15: #{edge_forward.1} parent=11 // pred_region
          %s185 = ssub.s32 16, 16
          %186 = vsyncadd [#allocation5], %s185
          %s188 = sshll.u32 %s0, 4
          %s189 = int_to_ptr.vmem [resolvable:$true] %s188
          %191 = dma.vmem_to_smem %s189, 16, [#allocation3], [#allocation5]
        $region16: #{edge_forward.1} parent=11 // pred_fallthru
          _
        // Predicated region
        $region17: #{edge_forward.1} parent=11 // pred_check
          %p192 = pneg %p70
        $region18: #{edge_forward.1} parent=11 // pred_check_branch
          %194 = sbr.rel (%p192) target = $region20
        $region19: #{edge_forward.1} parent=11 // pred_region
          _
        $region20: #{edge_forward.1} parent=11 // pred_fallthru
          _
        // Predicated region
        $region21: #{edge_forward.1} parent=11 // pred_check
          %p195 = pneg %p117
        $region22: #{edge_forward.1} parent=11 // pred_check_branch
          %197 = sbr.rel (%p195) target = $region24
        $region23: #{edge_forward.1} parent=11 // pred_region
          _
        $region24: #{edge_forward.1} parent=11 // pred_fallthru
          _
        // Predicated region
        $region25: #{edge_forward.1} parent=11 // pred_check
          %p198 = pneg %p138
        $region26: #{edge_forward.1} parent=11 // pred_check_branch
          %200 = sbr.rel (%p198) target = $region28
        $region27: #{edge_forward.1} parent=11 // pred_region
          _
        $region28: #{edge_forward.1} parent=11 // pred_fallthru
          _
      $region12: #{edge_forward.1} parent=5 // pred_fallthru
        _
      %p201 = scmp.lt.s32.totalorder %s16, 2
      // Predicated region
      $region29: #{edge_forward.1} parent=5 // pred_check
        %p202 = pneg %p201
      $region30: #{edge_forward.1} parent=5 // pred_check_branch
        %204 = sbr.rel (%p202) target = $region32
      $region31: #{edge_forward.1} parent=5 // pred_region
        // Predicated region
        $region33: #{edge_forward.1} parent=31 // pred_check
          %p205 = pneg %p90
        $region34: #{edge_forward.1} parent=31 // pred_check_branch
          %207 = sbr.rel (%p205) target = $region36
        $region35: #{edge_forward.1} parent=31 // pred_region
          %p208 = scmp.lt.s32.totalorder %s23, 1
          %s209 = scalar_select %p208, %s23, 1
          %s210 = smul.addr %s209, 8
          %s211 = smul.addr %s210, 8
          %s212 = scalar_lea.vmem %s2, %s211
        $region36: #{edge_forward.1} parent=31 // pred_fallthru
          _
      $region32: #{edge_forward.1} parent=5 // pred_fallthru
        _
      %p213 = scmp.le.s32.totalorder 1, %s16
      %p214 = scmp.lt.s32.totalorder %s16, 3
      %p215 = pnand %p213, %p214
      %p216 = pneg %p215
      // Predicated region
      $region37: #{edge_forward.1} parent=5 // pred_check
        _
      $region38: #{edge_forward.1} parent=5 // pred_check_branch
        %218 = sbr.rel (%p215) target = $region40
      $region39: #{edge_forward.1} parent=5 // pred_region
        %s219 = ssub.s32 %s16, 1
        // Predicated region
        $region41: #{edge_forward.1} parent=39 // pred_check
          %p220 = pneg %p49
        $region42: #{edge_forward.1} parent=39 // pred_check_branch
          %222 = sbr.rel (%p220) target = $region44
        $region43: #{edge_forward.1} parent=39 // pred_region
          %223 = dma.done [#allocation5], 16
        $region44: #{edge_forward.1} parent=39 // pred_fallthru
          _
        %224 = sfence
        %p225 = pneg %p49
        %p226 = pneg %p46
        %p227 = pneg %p70
        %p228 = pneg %p67
        %p229 = scmp.lt.s32.totalorder %s25, 1
        %s230 = scalar_select %p229, %s25, 1
        %s231 = smul.addr %s230, 8
        %s232 = smul.addr %s231, 8
        %s233 = scalar_lea.vmem %s2, %s232
        %p234 = pneg %p96
        %p235 = pneg %p93
        %p236 = pneg %p117
        %p237 = pneg %p114
        %p238 = pneg %p138
        %p239 = pneg %p135
        %p240 = pneg %p166
        %p241 = pneg %p163
        %s242 = sand.u32 %s153, 1
        %s243 = scalar_lea.sflag [#allocation4], %s242
        %s244 = sand.u32 %s153, 1
        %s245 = smul.addr %s244, 32
        %s246 = scalar_lea.vmem [#allocation6], %s245
        %p247 = scmp.lt.s32.totalorder %s25, 1
        %s248 = scalar_select %p247, %s25, 1
        %s249 = smul.addr %s248, 8
        %s250 = smul.addr %s249, 8
        %s251 = scalar_lea.vmem %s2, %s250
        %s252 = smul.u32 4, %s26
        %s253 = sld [smem:[#allocation3]]
        %v254 = vld [vmem:[%s251] sm:$0xff]
        %v255 = vld [vmem:[%s251 + $0x8] sm:$0xff]
        %v256 = vstv %s253
        %v257 = vmul.f32 %v256, %v254
        %v258 = vmul.f32 %v256, %v255
        %v259 = vadd.f32 %v257, 0.0
        %v260 = vadd.f32 %v258, 0.0
        %s261 = sld [smem:[#allocation3 + $0x1]]
        %s262 = scalar_lea.vmem %s251, 16
        %v263 = vld [vmem:[%s262] sm:$0xff]
        %v264 = vld [vmem:[%s262 + $0x8] sm:$0xff]
        %v265 = vstv %s261
        %v266 = vmul.f32 %v265, %v263
        %v267 = vmul.f32 %v265, %v264
        %v268 = vadd.f32 %v259, %v266
        %v269 = vadd.f32 %v260, %v267
        %s270 = sld [smem:[#allocation3 + $0x2]]
        %s271 = scalar_lea.vmem %s251, 32
        %v272 = vld [vmem:[%s271] sm:$0xff]
        %v273 = vld [vmem:[%s271 + $0x8] sm:$0xff]
        %v274 = vstv %s270
        %v275 = vmul.f32 %v274, %v272
        %v276 = vmul.f32 %v274, %v273
        %v277 = vadd.f32 %v268, %v275
        %v278 = vadd.f32 %v269, %v276
        %s279 = sld [smem:[#allocation3 + $0x3]]
        %s280 = scalar_lea.vmem %s251, 48
        %v281 = vld [vmem:[%s280] sm:$0xff]
        %v282 = vld [vmem:[%s280 + $0x8] sm:$0xff]
        %v283 = vstv %s279
        %v284 = vmul.f32 %v283, %v281
        %v285 = vmul.f32 %v283, %v282
        %v286 = vadd.f32 %v277, %v284
        %v287 = vadd.f32 %v278, %v285
        %s288 = sld [smem:[#allocation2]]
        %v289 = vstv %s288
        %v290 = vadd.f32 %v286, %v289
        %v291 = vadd.f32 %v287, %v289
        %v292 = vld [vmem:[%s4] sm:$0xff]
        %v293 = vld [vmem:[%s4 + $0x8] sm:$0xff]
        %vm294 = vcmask 130048
        %v296 = vsel %vm294, %v290, 0
        %v299 = vsel %vm294, %v291, 0
        %301 = vmatprep.subr.mxu0 0.0
        %302 = vmatpush1.msra.mxu0 %v292
        %303 = vmatprep.subr.mxu0 0.0
        %304 = vmatpush1.msra.mxu0 %v293
        %305 = vmatprep.subr.mxu0 0.0
        %306 = vmatpush1.msra.mxu0 0.0
        %307 = vmatprep.subr.mxu0 0.0
        %308 = vmatpush1.msra.mxu0 0.0
        %309 = vmatprep.subr.mxu0 0.0
        %310 = vmatpush1.msra.mxu0 0.0
        %311 = vmatprep.subr.mxu0 0.0
        %312 = vmatpush1.msra.mxu0 0.0
        %313 = vmatprep.subr.mxu0 0.0
        %314 = vmatpush1.msra.mxu0 0.0
        %315 = vmatprep.subr.mxu0 0.0
        %316 = vmatpush1.msra.mxu0 0.0
        %317 = vmatprep.subr.mxu0 0.0
        %318 = vmatpush1.msra.mxu0 0.0
        %319 = vmatprep.subr.mxu0 0.0
        %320 = vmatpush1.msra.mxu0 0.0
        %321 = vmatprep.subr.mxu0 0.0
        %322 = vmatpush1.msra.mxu0 0.0
        %323 = vmatprep.subr.mxu0 0.0
        %324 = vmatpush1.msra.mxu0 0.0
        %325 = vmatprep.subr.mxu0 0.0
        %326 = vmatpush1.msra.mxu0 0.0
        %327 = vmatprep.subr.mxu0 0.0
        %328 = vmatpush1.msra.mxu0 0.0
        %329 = vmatprep.subr.mxu0 0.0
        %330 = vmatpush1.msra.mxu0 0.0
        %331 = vmatprep.subr.mxu0 0.0
        %332 = vmatpush1.msra.mxu0 0.0
        %333 = vmatprep.subr.mxu0 0.0
        %334 = vmatpush1.msra.mxu0 0.0
        %335 = vmatprep.subr.mxu0 0.0
        %336 = vmatpush1.msra.mxu0 0.0
        %337 = vmatprep.subr.mxu0 0.0
        %338 = vmatpush1.msra.mxu0 0.0
        %339 = vmatprep.subr.mxu0 0.0
        %340 = vmatpush1.msra.mxu0 0.0
        %341 = vmatprep.subr.mxu0 0.0
        %342 = vmatpush1.msra.mxu0 0.0
        %343 = vmatprep.subr.mxu0 0.0
        %344 = vmatpush1.msra.mxu0 0.0
        %345 = vmatprep.subr.mxu0 0.0
        %346 = vmatpush1.msra.mxu0 0.0
        %347 = vmatprep.subr.mxu0 0.0
        %348 = vmatpush1.msra.mxu0 0.0
        %349 = vmatprep.subr.mxu0 0.0
        %350 = vmatpush1.msra.mxu0 0.0
        %351 = vmatprep.subr.mxu0 0.0
        %352 = vmatpush1.msra.mxu0 0.0
        %353 = vmatprep.subr.mxu0 0.0
        %354 = vmatpush1.msra.mxu0 0.0
        %355 = vmatprep.subr.mxu0 0.0
        %356 = vmatpush1.msra.mxu0 0.0
        %357 = vmatprep.subr.mxu0 0.0
        %358 = vmatpush1.msra.mxu0 0.0
        %359 = vmatprep.subr.mxu0 0.0
        %360 = vmatpush1.msra.mxu0 0.0
        %361 = vmatprep.subr.mxu0 0.0
        %362 = vmatpush1.msra.mxu0 0.0
        %363 = vmatprep.subr.mxu0 0.0
        %364 = vmatpush1.msra.mxu0 0.0
        %365 = vmatprep.mubr.f32.mxu0 0.0
        %366 = vmatmul.mubr.f32.gmra.mrb[0].mxu0 %v296
        %v367 = vpop.f32.mrb[0].mxu0
        %v368 = vadd.f32 0.0, %v367
        %v369 = vpop.f32.mrb[0].mxu0
        %370 = vmatprep.mubr.f32.mxu0 0.0
        %371 = vmatmul.mubr.f32.gmra.mrb[0].mxu0 %v299
        %v372 = vpop.f32.mrb[0].mxu0
        %v373 = vadd.f32 0.0, %v372
        %v374 = vpop.f32.mrb[0].mxu0
        %375 = vdwg.mxu0
        %s376 = smul.u32 %s26, 32
        %s377 = scalar_lea.vmem %s3, %s376
        %v378 = vld [vmem:[%s377] sm:$0xff]
        %v379 = vld [vmem:[%s377 + $0x8] sm:$0xff]
        %v380 = vld [vmem:[%s377 + $0x10] sm:$0xff]
        %v381 = vld [vmem:[%s377 + $0x18] sm:$0xff]
        %v382 = vld [vmem:[%s377 + $0x20] sm:$0x3]
        %v384 = vsel %vm294, %v378, 0
        %v387 = vsel %vm294, %v379, 0
        %v390 = vsel %vm294, %v380, 0
        %v393 = vsel %vm294, %v381, 0
        %v396 = vsel %vm294, %v382, 0
        %398 = vmatprep.subr.mxu0 0.0
        %399 = vmatpush1.msra.mxu0 %v368
        %400 = vmatprep.subr.mxu0 0.0
        %401 = vmatpush1.msra.mxu0 %v373
        %402 = vmatprep.subr.mxu0 0.0
        %403 = vmatpush1.msra.mxu0 0.0
        %404 = vmatprep.subr.mxu0 0.0
        %405 = vmatpush1.msra.mxu0 0.0
        %406 = vmatprep.subr.mxu0 0.0
        %407 = vmatpush1.msra.mxu0 0.0
        %408 = vmatprep.subr.mxu0 0.0
        %409 = vmatpush1.msra.mxu0 0.0
        %410 = vmatprep.subr.mxu0 0.0
        %411 = vmatpush1.msra.mxu0 0.0
        %412 = vmatprep.subr.mxu0 0.0
        %413 = vmatpush1.msra.mxu0 0.0
        %414 = vmatprep.subr.mxu0 0.0
        %415 = vmatpush1.msra.mxu0 0.0
        %416 = vmatprep.subr.mxu0 0.0
        %417 = vmatpush1.msra.mxu0 0.0
        %418 = vmatprep.subr.mxu0 0.0
        %419 = vmatpush1.msra.mxu0 0.0
        %420 = vmatprep.subr.mxu0 0.0
        %421 = vmatpush1.msra.mxu0 0.0
        %422 = vmatprep.subr.mxu0 0.0
        %423 = vmatpush1.msra.mxu0 0.0
        %424 = vmatprep.subr.mxu0 0.0
        %425 = vmatpush1.msra.mxu0 0.0
        %426 = vmatprep.subr.mxu0 0.0
        %427 = vmatpush1.msra.mxu0 0.0
        %428 = vmatprep.subr.mxu0 0.0
        %429 = vmatpush1.msra.mxu0 0.0
        %430 = vmatprep.subr.mxu0 0.0
        %431 = vmatpush1.msra.mxu0 0.0
        %432 = vmatprep.subr.mxu0 0.0
        %433 = vmatpush1.msra.mxu0 0.0
        %434 = vmatprep.subr.mxu0 0.0
        %435 = vmatpush1.msra.mxu0 0.0
        %436 = vmatprep.subr.mxu0 0.0
        %437 = vmatpush1.msra.mxu0 0.0
        %438 = vmatprep.subr.mxu0 0.0
        %439 = vmatpush1.msra.mxu0 0.0
        %440 = vmatprep.subr.mxu0 0.0
        %441 = vmatpush1.msra.mxu0 0.0
        %442 = vmatprep.subr.mxu0 0.0
        %443 = vmatpush1.msra.mxu0 0.0
        %444 = vmatprep.subr.mxu0 0.0
        %445 = vmatpush1.msra.mxu0 0.0
        %446 = vmatprep.subr.mxu0 0.0
        %447 = vmatpush1.msra.mxu0 0.0
        %448 = vmatprep.subr.mxu0 0.0
        %449 = vmatpush1.msra.mxu0 0.0
        %450 = vmatprep.subr.mxu0 0.0
        %451 = vmatpush1.msra.mxu0 0.0
        %452 = vmatprep.subr.mxu0 0.0
        %453 = vmatpush1.msra.mxu0 0.0
        %454 = vmatprep.subr.mxu0 0.0
        %455 = vmatpush1.msra.mxu0 0.0
        %456 = vmatprep.subr.mxu0 0.0
        %457 = vmatpush1.msra.mxu0 0.0
        %458 = vmatprep.subr.mxu0 0.0
        %459 = vmatpush1.msra.mxu0 0.0
        %460 = vmatprep.subr.mxu0 0.0
        %461 = vmatpush1.msra.mxu0 0.0
        %462 = vmatprep.mubr.f32.mxu0 0.0
        %463 = vmatmul.mubr.f32.gmra.mrb[0].mxu0 %v384
        %v464 = vpop.f32.mrb[0].mxu0
        %v465 = vadd.f32 0.0, %v464
        %v466 = vpop.f32.mrb[0].mxu0
        %467 = vmatprep.mubr.f32.mxu0 0.0
        %468 = vmatmul.mubr.f32.gmra.mrb[0].mxu0 %v387
        %v469 = vpop.f32.mrb[0].mxu0
        %v470 = vadd.f32 0.0, %v469
        %v471 = vpop.f32.mrb[0].mxu0
        %472 = vmatprep.mubr.f32.mxu0 0.0
        %473 = vmatmul.mubr.f32.gmra.mrb[0].mxu0 %v390
        %v474 = vpop.f32.mrb[0].mxu0
        %v475 = vadd.f32 0.0, %v474
        %v476 = vpop.f32.mrb[0].mxu0
        %477 = vmatprep.mubr.f32.mxu0 0.0
        %478 = vmatmul.mubr.f32.gmra.mrb[0].mxu0 %v393
        %v479 = vpop.f32.mrb[0].mxu0
        %v480 = vadd.f32 0.0, %v479
        %v481 = vpop.f32.mrb[0].mxu0
        %482 = vmatprep.mubr.f32.mxu0 0.0
        %483 = vmatmul.mubr.f32.gmra.mrb[0].mxu0 %v396
        %v484 = vpop.f32.mrb[0].mxu0
        %v485 = vadd.f32 0.0, %v484
        %v486 = vpop.f32.mrb[0].mxu0
        %487 = vdwg.mxu0
        %v488 = vmul.f32 %v465, 2.0
        %v489 = vmul.f32 %v470, 2.0
        %v490 = vmul.f32 %v475, 2.0
        %v491 = vmul.f32 %v480, 2.0
        %v492 = vmul.f32 %v485, 2.0
        %vm498 = vcmask 1046528
        %v499 = vrot.slane %v488, 1
        %v500 = vrot.slane %v489, 1
        %v501 = vsel %vm498, %v499, %v500
        %v502 = vrot.slane %v490, 1
        %v503 = vsel %vm498, %v500, %v502
        %v504 = vrot.slane %v491, 1
        %v505 = vsel %vm498, %v502, %v504
        %v506 = vrot.slane %v492, 1
        %v507 = vsel %vm498, %v504, %v506
        %v512 = vadd.f32 %v465, %v501
        %v513 = vadd.f32 %v470, %v503
        %v514 = vadd.f32 %v475, %v505
        %v515 = vadd.f32 %v480, %v507
        %vm521 = vcmask 1045504
        %v522 = vrot.slane %v465, 2
        %v523 = vrot.slane %v470, 2
        %v524 = vsel %vm521, %v522, %v523
        %v525 = vrot.slane %v475, 2
        %v526 = vsel %vm521, %v523, %v525
        %v527 = vrot.slane %v480, 2
        %v528 = vsel %vm521, %v525, %v527
        %v529 = vrot.slane %v485, 2
        %v530 = vsel %vm521, %v527, %v529
        %v535 = vadd.f32 %v512, %v524
        %v536 = vadd.f32 %v513, %v526
        %v537 = vadd.f32 %v514, %v528
        %v538 = vadd.f32 %v515, %v530
        %543 = vrot.lane.b32.xlu0 %v535, 126
        %v544 = vpop.permute.xlu0 %543
        %545 = vrot.lane.b32.xlu0 %v536, 126
        %v546 = vpop.permute.xlu0 %545
        %547 = vrot.lane.b32.xlu0 %v537, 126
        %v548 = vpop.permute.xlu0 %547
        %549 = vrot.lane.b32.xlu0 %v538, 126
        %v550 = vpop.permute.xlu0 %549
        %v555 = vsub.f32 %v535, %v544
        %v556 = vsub.f32 %v536, %v546
        %v557 = vsub.f32 %v537, %v548
        %v558 = vsub.f32 %v538, %v550
        %559 = vrot.lane.b32.xlu0 %v488, 127
        %v560 = vpop.permute.xlu0 %559
        %561 = vrot.lane.b32.xlu0 %v489, 127
        %v562 = vpop.permute.xlu0 %561
        %563 = vrot.lane.b32.xlu0 %v490, 127
        %v564 = vpop.permute.xlu0 %563
        %565 = vrot.lane.b32.xlu0 %v491, 127
        %v566 = vpop.permute.xlu0 %565
        %v571 = vadd.f32 %v465, %v560
        %v572 = vadd.f32 %v470, %v562
        %v573 = vadd.f32 %v475, %v564
        %v574 = vadd.f32 %v480, %v566
        %575 = vrot.lane.b32.xlu0 %v465, 126
        %v576 = vpop.permute.xlu0 %575
        %577 = vrot.lane.b32.xlu0 %v470, 126
        %v578 = vpop.permute.xlu0 %577
        %579 = vrot.lane.b32.xlu0 %v475, 126
        %v580 = vpop.permute.xlu0 %579
        %581 = vrot.lane.b32.xlu0 %v480, 126
        %v582 = vpop.permute.xlu0 %581
        %v587 = vadd.f32 %v571, %v576
        %v588 = vadd.f32 %v572, %v578
        %v589 = vadd.f32 %v573, %v580
        %v590 = vadd.f32 %v574, %v582
        %591 = vrot.lane.b32.xlu0 %v492, 127
        %v592 = vpop.permute.xlu0 %591
        %v594 = vadd.f32 %v485, %v592
        %595 = vrot.lane.b32.xlu0 %v485, 126
        %v596 = vpop.permute.xlu0 %595
        %v598 = vadd.f32 %v594, %v596
        %v604 = vrot.slane %v587, 2
        %v605 = vrot.slane %v588, 2
        %v606 = vsel %vm521, %v604, %v605
        %v607 = vrot.slane %v589, 2
        %v608 = vsel %vm521, %v605, %v607
        %v609 = vrot.slane %v590, 2
        %v610 = vsel %vm521, %v607, %v609
        %v611 = vrot.slane %v598, 2
        %v612 = vsel %vm521, %v609, %v611
        %v617 = vsub.f32 %v587, %v606
        %v618 = vsub.f32 %v588, %v608
        %v619 = vsub.f32 %v589, %v610
        %v620 = vsub.f32 %v590, %v612
        %v621 = vmul.f32 %v555, 0.999995
        %v622 = vmul.f32 %v556, 0.999995
        %v623 = vmul.f32 %v557, 0.999995
        %v624 = vmul.f32 %v558, 0.999995
        %v625 = vmul.f32 %v617, 0.999995
        %v626 = vmul.f32 %v618, 0.999995
        %v627 = vmul.f32 %v619, 0.999995
        %v628 = vmul.f32 %v620, 0.999995
        %v629 = vmul.f32 %v621, %v621
        %v630 = vmul.f32 %v622, %v622
        %v631 = vmul.f32 %v623, %v623
        %v632 = vmul.f32 %v624, %v624
        %v633 = vmul.f32 %v625, %v625
        %v634 = vmul.f32 %v626, %v626
        %v635 = vmul.f32 %v627, %v627
        %v636 = vmul.f32 %v628, %v628
        %v637 = vadd.f32 %v629, %v633
        %v638 = vadd.f32 %v630, %v634
        %v639 = vadd.f32 %v631, %v635
        %v640 = vadd.f32 %v632, %v636
        %v641 = vrsqrt.pop %v637
        %v642 = vmul.f32 %v637, %v641
        %vm643 = vcmp.eq.f32.partialorder %v637, inf
        %v644 = vsel %vm643, %v637, %v642
        %vm645 = vcmp.eq.f32.partialorder %v637, 0.0
        %v646 = vand.u32 %v637, 2147483648
        %v647 = vsel %vm645, %v646, %v644
        %v648 = vrsqrt.pop %v638
        %v649 = vmul.f32 %v638, %v648
        %vm650 = vcmp.eq.f32.partialorder %v638, inf
        %v651 = vsel %vm650, %v638, %v649
        %vm652 = vcmp.eq.f32.partialorder %v638, 0.0
        %v653 = vand.u32 %v638, 2147483648
        %v654 = vsel %vm652, %v653, %v651
        %v655 = vrsqrt.pop %v639
        %v656 = vmul.f32 %v639, %v655
        %vm657 = vcmp.eq.f32.partialorder %v639, inf
        %v658 = vsel %vm657, %v639, %v656
        %vm659 = vcmp.eq.f32.partialorder %v639, 0.0
        %v660 = vand.u32 %v639, 2147483648
        %v661 = vsel %vm659, %v660, %v658
        %v662 = vrsqrt.pop %v640
        %v663 = vmul.f32 %v640, %v662
        %vm664 = vcmp.eq.f32.partialorder %v640, inf
        %v665 = vsel %vm664, %v640, %v663
        %vm666 = vcmp.eq.f32.partialorder %v640, 0.0
        %v667 = vand.u32 %v640, 2147483648
        %v668 = vsel %vm666, %v667, %v665
        %v669 = vsub.f32 0.0, %v647
        %v670 = vsub.f32 0.0, %v654
        %v671 = vsub.f32 0.0, %v661
        %v672 = vsub.f32 0.0, %v668
        %v673 = vmul.f32 %v669, 1.442695
        %v674 = vpow.pop %v673
        %v675 = vmul.f32 %v670, 1.442695
        %v676 = vpow.pop %v675
        %v677 = vmul.f32 %v671, 1.442695
        %v678 = vpow.pop %v677
        %v679 = vmul.f32 %v672, 1.442695
        %v680 = vpow.pop %v679
        %v681 = vadd.f32 %v674, 1.0
        %v682 = vadd.f32 %v676, 1.0
        %v683 = vadd.f32 %v678, 1.0
        %v684 = vadd.f32 %v680, 1.0
        %v685 = vrcp.pop %v681
        %v686 = vmul.f32 1.0, %v685
        %v687 = vrcp.pop %v682
        %v688 = vmul.f32 1.0, %v687
        %v689 = vrcp.pop %v683
        %v690 = vmul.f32 1.0, %v689
        %v691 = vrcp.pop %v684
        %v692 = vmul.f32 1.0, %v691
        %v693 = vrot.slane %v465, 1
        %v694 = vrot.slane %v470, 1
        %v695 = vsel %vm498, %v693, %v694
        %v696 = vrot.slane %v475, 1
        %v697 = vsel %vm498, %v694, %v696
        %v698 = vrot.slane %v480, 1
        %v699 = vsel %vm498, %v696, %v698
        %v700 = vrot.slane %v485, 1
        %v701 = vsel %vm498, %v698, %v700
        %702 = vrot.lane.b32.xlu0 %v695, 127
        %v703 = vpop.permute.xlu0 %702
        %704 = vrot.lane.b32.xlu0 %v697, 127
        %v705 = vpop.permute.xlu0 %704
        %706 = vrot.lane.b32.xlu0 %v699, 127
        %v707 = vpop.permute.xlu0 %706
        %708 = vrot.lane.b32.xlu0 %v701, 127
        %v709 = vpop.permute.xlu0 %708
        %v714 = vmul.f32 %v686, %v703
        %v715 = vmul.f32 %v688, %v705
        %v716 = vmul.f32 %v690, %v707
        %v717 = vmul.f32 %v692, %v709
        %vm718 = vcmask 261120
        %719 = vst.msk [vmem:[%s246] sm:$0xff] %vm718, %v714
        %720 = vst.msk [vmem:[%s246 + $0x8] sm:$0xff] %vm718, %v715
        %721 = vst.msk [vmem:[%s246 + $0x10] sm:$0xff] %vm718, %v716
        %722 = vst.msk [vmem:[%s246 + $0x18] sm:$0xff] %vm718, %v717
        %s723 = sand.u32 %s153, 1
        %s724 = scalar_lea.sflag [#allocation4], %s723
        %s725 = sand.u32 %s153, 1
        %s726 = smul.addr %s725, 32
        %s727 = scalar_lea.vmem [#allocation6], %s726
        // Predicated region
        $region45: #{edge_forward.1} parent=39 // pred_check
          %p728 = pneg %p163
        $region46: #{edge_forward.1} parent=39 // pred_check_branch
          %730 = sbr.rel (%p728) target = $region48
        $region47: #{edge_forward.1} parent=39 // pred_region
          %s731 = smul.u32 4, %s26
          %s733 = ssub.s32 512, 512
          %734 = vsyncadd %s724, %s733
          %s735 = smul.addr %s25, 4
          %s736 = sadd.s32 %s731, %s735
          %s737 = smul.addr %s736, 128
          %s738 = scalar_lea.hbm %s5, %s737
          %s739 = sshll.u32 %s727, 4
          %s740 = int_to_ptr.vmem [resolvable:$true] %s739
          %745 = dma.vmem_to_hbm [thread:$0]  %s740, 512, %s738, %s724, 128, 128, 8
        $region48: #{edge_forward.1} parent=39 // pred_fallthru
          _
      $region40: #{edge_forward.1} parent=5 // pred_fallthru
        _
      %p746 = scmp.le.s32.totalorder 2, %s16
      // Predicated region
      $region49: #{edge_forward.1} parent=5 // pred_check
        %p747 = pneg %p746
      $region50: #{edge_forward.1} parent=5 // pred_check_branch
        %749 = sbr.rel (%p747) target = $region52
      $region51: #{edge_forward.1} parent=5 // pred_region
        %s750 = ssub.s32 %s16, 2
        // Predicated region
        $region53: #{edge_forward.1} parent=51 // pred_check
          %p751 = pneg %p169
        $region54: #{edge_forward.1} parent=51 // pred_check_branch
          %753 = sbr.rel (%p751) target = $region56
        $region55: #{edge_forward.1} parent=51 // pred_region
          %s754 = sand.u32 %s154, 1
          %s755 = scalar_lea.sflag [#allocation4], %s754
          %s756 = sand.u32 %s154, 1
          %s757 = smul.addr %s756, 32
          %s758 = scalar_lea.vmem [#allocation6], %s757
          %759 = dma.done %s755, 512
        $region56: #{edge_forward.1} parent=51 // pred_fallthru
          _
      $region52: #{edge_forward.1} parent=5 // pred_fallthru
        _
    $region6: #{edge_forward.1} parent=1 // loop_footer
      %s20 = sadd.s32 1, %s16
    $region7: #{edge_forward.1} parent=1 // loop_footer_branch
      %15 = sbr.rel target = $region3
    $region8: #{edge_forward.1} parent=1 // loop_exit
      _
    %760 = vsyncpa [#allocation4], 1
    %s761 = scalar_lea.sflag [#allocation4], 1
    %762 = vsyncpa %s761, 1
    %763 = vsyncpa [#allocation5], 1
    %s764 = scalar_lea.sflag [#allocation5], 1
    %765 = vsyncpa %s764, 1

</llo_original>
